<compile_context>
chip_gen: v6e
topology: v6e:2x2x1
jax: 0.10.0
libtpu: 0.0.40
codegen_flags: <defaults>
</compile_context>

<pallas_src>
import functools

import jax
import jax.numpy as jnp
from jax.experimental import pallas as pl
from jax.experimental.pallas import tpu as pltpu

# Deterministic "parameters" from the module __init__ / kwargs.
TARGET = (0.0457, 0.0458)   # default target from Maze2dAvoidGuide.__init__
RADIUS = 0.5                # required kwarg 'radius'; fixed deterministically


def _avoid_guide_kernel(x_ref, tgt_ref, sely_ref, out_ref, *,
                        radius_sq, neg_inv_t):
    # x_ref:    (TB, 6*T) tile of the flattened trace (lane-dense, one DMA stream).
    # tgt_ref:  (1, 6*T) f32: target_x at lanes 6t+2, target_y at lanes 6t+3, 0 else.
    # sely_ref: (1, 6*T) f32: 1.0 at the pos_y lanes (6t+3), 0 elsewhere.
    # out_ref:  (TB, 1) f32.
    v = x_ref[...].astype(jnp.float32)
    d = v - tgt_ref[...]                        # sublane-broadcast of constant row
    sq = d * d
    # Pair dx^2 (lane 6t+2) under dy^2 (lane 6t+3): rotate +1 along the lane axis.
    d2 = sq + pltpu.roll(sq, shift=1, axis=1)   # valid at pos_y lanes; rest masked
    dist = jnp.sqrt(d2)
    eff = jnp.where(d2 <= radius_sq, dist, 0.0) * sely_ref[...]
    # mean over T and the forward() negation folded into one scale.
    out_ref[...] = jnp.sum(eff, axis=1, keepdims=True) * neg_inv_t


def _vmem_config():
    """(double-buffered input budget, vmem_limit_bytes) gated per TPU generation."""
    budget, limit = 12 * 1024 * 1024, 32 * 1024 * 1024   # v7x-safe (64 MiB / TC)
    try:
        cap = getattr(pltpu.get_tpu_info(), "vmem_capacity_bytes", 0)
        if cap >= 100 * 1024 * 1024:                      # v5e / v6e: 128 MiB
            budget, limit = 16 * 1024 * 1024, 64 * 1024 * 1024
    except Exception:
        pass
    return budget, limit


def _choose_batch_tile(b_pad8, row_bytes, vmem_budget_bytes, max_tile=4096):
    """Largest multiple-of-8 batch tile that fits the budget and still yields
    enough grid steps to engage both v7x TensorCores / overlap DMA with compute."""
    per_row = 2 * row_bytes                    # single input stream, double-buffered
    tb = max(8, min(max_tile, (vmem_budget_bytes // per_row) // 8 * 8))
    tb = min(tb, b_pad8)
    if b_pad8 >= 32:
        min_steps = 4
    elif b_pad8 >= 16:
        min_steps = 2
    else:
        min_steps = 1
    if min_steps > 1:
        tb = min(tb, max(8, (b_pad8 // min_steps) // 8 * 8))
    return tb


def maze2d_avoid_guide_forward(x, cond=None, t=None,
                               target=TARGET, radius=RADIUS):
    """Equivalent of Maze2dAvoidGuide.forward(x, cond, t). Returns (B,) float32."""
    del cond, t  # unused by the reference forward
    B, T, F = x.shape
    L = T * F

    # Free, contiguous reshape: full trace read exactly once by the kernel; the
    # channel selection (pos_x / pos_y) is done in-kernel, no HBM round trip.
    x2d = x.reshape(B, L)

    ch = jnp.arange(L, dtype=jnp.int32) % F
    tgt_row = jnp.where(ch == 2, jnp.float32(target[0]),
                        jnp.where(ch == 3, jnp.float32(target[1]),
                                  jnp.float32(0.0))).reshape(1, L)
    sel_y = (ch == 3).astype(jnp.float32).reshape(1, L)

    budget, limit = _vmem_config()
    b_pad8 = ((B + 7) // 8) * 8
    row_bytes = L * jnp.dtype(x.dtype).itemsize
    tb = _choose_batch_tile(b_pad8, row_bytes, budget)
    b_pad = ((B + tb - 1) // tb) * tb
    if b_pad != B:
        # Padded rows reduce over T independently and are sliced off below.
        x2d = jnp.pad(x2d, ((0, b_pad - B), (0, 0)))

    kernel = functools.partial(
        _avoid_guide_kernel,
        radius_sq=float(radius) * float(radius),
        neg_inv_t=-1.0 / float(T),
    )

    out = pl.pallas_call(
        kernel,
        out_shape=jax.ShapeDtypeStruct((b_pad, 1), jnp.float32),
        grid=(b_pad // tb,),
        in_specs=[
            pl.BlockSpec((tb, L), lambda i: (i, 0)),
            pl.BlockSpec((1, L), lambda i: (0, 0)),   # fetched once (index constant)
            pl.BlockSpec((1, L), lambda i: (0, 0)),
        ],
        out_specs=pl.BlockSpec((tb, 1), lambda i: (i, 0)),
        compiler_params=pltpu.CompilerParams(
            dimension_semantics=("parallel",),
            vmem_limit_bytes=limit,
        ),
    )(x2d, tgt_row, sel_y)

    return out[:B, 0]


def _reference_forward(x, target=TARGET, radius=RADIUS):
    pos_x = x[:, :, 2].astype(jnp.float32)
    pos_y = x[:, :, 3].astype(jnp.float32)
    dist = jnp.sqrt((pos_x - target[0]) ** 2 + (pos_y - target[1]) ** 2)
    eff = dist * (dist <= radius).astype(jnp.float32)
    return -jnp.mean(eff, axis=1)


if __name__ == "__main__":
    key = jax.random.PRNGKey(0)
    k1, k2 = jax.random.split(key)
    F = 6

    # Test 1: f32 input, batch not a multiple of 8 (padding path, single grid step).
    B1, T1 = 5, 128
    x1 = jax.random.uniform(k1, (B1, T1, F), dtype=jnp.float32,
                            minval=-1.0, maxval=1.0)
    y1 = jax.block_until_ready(maze2d_avoid_guide_forward(x1))
    y1_ref = _reference_forward(x1)
    assert y1.shape == (B1,)
    assert jnp.allclose(y1, y1_ref, atol=1e-5, rtol=1e-5), (y1, y1_ref)

    # Test 2: bf16 input, batch large enough to force a multi-step grid
    # (exercises the min-steps cap, the pipeline, and the in-kernel f32 cast).
    B2, T2 = 32, 384
    x2 = jax.random.uniform(k2, (B2, T2, F), dtype=jnp.float32,
                            minval=-1.0, maxval=1.0).astype(jnp.bfloat16)
    y2 = jax.block_until_ready(maze2d_avoid_guide_forward(x2))
    y2_ref = _reference_forward(x2)
    assert y2.shape == (B2,)
    assert jnp.allclose(y2, y2_ref, atol=1e-5, rtol=1e-5), (y2, y2_ref)

    print("KERNEL_OK")
</pallas_src>

<mosaic_0001>
module attributes {stable_mosaic.version = 11 : i64} {
  func.func @_avoid_guide_kernel(%arg0: i32, %arg1: memref<8x768xf32, #tpu.memory_space<vmem>>, %arg2: memref<1x768xf32, #tpu.memory_space<vmem>>, %arg3: memref<1x768xf32, #tpu.memory_space<vmem>>, %arg4: memref<8x1xf32, #tpu.memory_space<vmem>>) attributes {dimension_semantics = [#tpu.dimension_semantics<parallel>], iteration_bounds = array<i64: 1>, scalar_prefetch = 0 : i64, scratch_operands = 0 : i64, tpu.core_type = #tpu.core_type<tc>, window_params = [{transform_indices = @transform_0, window_bounds = array<i64: 8, 768>}, {pipeline_mode = #tpu.pipeline_mode<synchronous>, transform_indices = @transform_1, window_bounds = array<i64: 1, 768>}, {pipeline_mode = #tpu.pipeline_mode<synchronous>, transform_indices = @transform_2, window_bounds = array<i64: 1, 768>}, {transform_indices = @transform_3, window_bounds = array<i64: 8, 1>}]} {
    %c0 = arith.constant 0 : index
    %c0_0 = arith.constant 0 : index
    %0 = vector.load %arg1[%c0, %c0_0] : memref<8x768xf32, #tpu.memory_space<vmem>>, vector<8x768xf32>
    %c0_1 = arith.constant 0 : index
    %c0_2 = arith.constant 0 : index
    %1 = vector.load %arg2[%c0_1, %c0_2] : memref<1x768xf32, #tpu.memory_space<vmem>>, vector<1x768xf32>
    %2 = vector.broadcast %1 : vector<1x768xf32> to vector<8x768xf32>
    %3 = arith.subf %0, %2 : vector<8x768xf32>
    %4 = arith.mulf %3, %3 : vector<8x768xf32>
    %c1_i32 = arith.constant 1 : i32
    %5 = tpu.dynamic_rotate %4 by %c1_i32 dim 1 : vector<8x768xf32>, i32 -> vector<8x768xf32>
    %6 = arith.addf %4, %5 : vector<8x768xf32>
    %7 = math.sqrt %6 : vector<8x768xf32>
    %cst = arith.constant 2.500000e-01 : f32
    %8 = vector.broadcast %cst : f32 to vector<8x768xf32>
    %9 = arith.cmpf ole, %6, %8 : vector<8x768xf32>
    %cst_3 = arith.constant 0.000000e+00 : f32
    %10 = vector.broadcast %cst_3 : f32 to vector<8x768xf32>
    %11 = arith.select %9, %7, %10 : vector<8x768xi1>, vector<8x768xf32>
    %c0_4 = arith.constant 0 : index
    %c0_5 = arith.constant 0 : index
    %12 = vector.load %arg3[%c0_4, %c0_5] : memref<1x768xf32, #tpu.memory_space<vmem>>, vector<1x768xf32>
    %13 = vector.broadcast %12 : vector<1x768xf32> to vector<8x768xf32>
    %14 = arith.mulf %11, %13 : vector<8x768xf32>
    %cst_6 = arith.constant dense<0.000000e+00> : vector<8xf32>
    %15 = vector.multi_reduction <add>, %14, %cst_6 [1] : vector<8x768xf32> to vector<8xf32>
    %16 = vector.shape_cast %15 : vector<8xf32> to vector<8x1xf32>
    %cst_7 = arith.constant -7.812500e-03 : f32
    %17 = vector.broadcast %cst_7 : f32 to vector<8x1xf32>
    %18 = arith.mulf %16, %17 : vector<8x1xf32>
    %c0_8 = arith.constant 0 : index
    %c0_9 = arith.constant 0 : index
    %19 = vector.load %arg4[%c0_8, %c0_9] : memref<8x1xf32, #tpu.memory_space<vmem>>, vector<8x1xf32>
    tpu.vector_store %arg4[%c0_8, %c0_9], %18 {strides = array<i32>} : memref<8x1xf32, #tpu.memory_space<vmem>>, vector<8x1xf32>,
    return
  }
  func.func @transform_0(%arg0: i32) -> (i32, i32) {
    %c0_i32 = arith.constant 0 : i32
    %c0_i32_0 = arith.constant 0 : i32
    return %arg0, %c0_i32 : i32, i32
  }
  func.func @transform_1(%arg0: i32) -> (i32, i32) {
    %c0_i32 = arith.constant 0 : i32
    %c0_i32_0 = arith.constant 0 : i32
    %c0_i32_1 = arith.constant 0 : i32
    return %c0_i32, %c0_i32_0 : i32, i32
  }
  func.func @transform_2(%arg0: i32) -> (i32, i32) {
    %c0_i32 = arith.constant 0 : i32
    %c0_i32_0 = arith.constant 0 : i32
    %c0_i32_1 = arith.constant 0 : i32
    return %c0_i32, %c0_i32_0 : i32, i32
  }
  func.func @transform_3(%arg0: i32) -> (i32, i32) {
    %c0_i32 = arith.constant 0 : i32
    %c0_i32_0 = arith.constant 0 : i32
    return %arg0, %c0_i32 : i32, i32
  }
}

</mosaic_0001>

<llo_original>
// kernel: tpu_custom_call.1
$region0: #{tpu_custom_call.1}
  #allocation0 [shape = 'u32[]', space=smem, size = 0x4, offset = 0x4, fixed_abs, tag = 'smem constant byte address 0x4 - core index']
  #allocation1 [shape = 'u32[144,128]{1,0:T(1,128)}', space=vmem, size = 0x12000, scoped, tag = 'internal scratch']
  %s0 = inlined_call_operand.hbm [shape: f32[8,768], index: 0, kind: input, shape index: {}]
  %s1 = inlined_call_operand.hbm [shape: f32[1,768], index: 1, kind: input, shape index: {}]
  %s2 = inlined_call_operand.hbm [shape: f32[1,768], index: 2, kind: input, shape index: {}]
  %s3 = inlined_call_operand.vmem [shape: f32[8,1], index: 3, kind: output, shape index: {}]
  %s4 = sld [smem:[#allocation0]]
  $region34: #{tpu_custom_call.1} parent=0
    _
  %s6 = ssub.s32 1, %s4
  %s7 = scalar_select 0, %s6, %s4
  $region1: #{tpu_custom_call.1} parent=0
    #allocation2 [shape = 'u8[24576]{0}', space=vmem, size = 0x6000, scoped, tag = 'input window, operand 0, single buffered']
    #allocation3 [shape = 's32[1]{0}', space=sflag, size = 0x4, scoped, tag = 'scoped memory for tpu_custom_call.1']
    #allocation4 [shape = 'u8[3072]{0}', space=vmem, size = 0xc00, scoped, tag = 'input window, operand 1, single buffered']
    #allocation5 [shape = 's32[1]{0}', space=sflag, size = 0x4, scoped, tag = 'scoped memory for tpu_custom_call.1']
    #allocation6 [shape = 'u8[3072]{0}', space=vmem, size = 0xc00, scoped, tag = 'input window, operand 2, single buffered']
    %8 = vsyncpa [#allocation3], 0
    %9 = vsyncpa [#allocation5], 0
    // Predicated region
    $region2: #{tpu_custom_call.1} parent=1 // pred_check
      _
    $region3: #{tpu_custom_call.1} parent=1 // pred_check_branch
      %11 = sbr.rel (0) target = $region5
    $region4: #{tpu_custom_call.1} parent=1 // pred_region
      %s13 = ssub.s32 768, 768
      %14 = vsyncadd [#allocation3], %s13
      %s16 = sshll.u32 [#allocation2], 4
      %s17 = int_to_ptr.vmem [resolvable:$true] %s16
      %19 = dma.hbm_to_vmem [thread:$0]  %s0, 768, %s17, [#allocation3]
    $region5: #{tpu_custom_call.1} parent=1 // pred_fallthru
      _
    // Predicated region
    $region6: #{tpu_custom_call.1} parent=1 // pred_check
      _
    $region7: #{tpu_custom_call.1} parent=1 // pred_check_branch
      %21 = sbr.rel (0) target = $region9
    $region8: #{tpu_custom_call.1} parent=1 // pred_region
      %s23 = ssub.s32 96, 96
      %24 = vsyncadd [#allocation5], %s23
      %s26 = sshll.u32 [#allocation4], 4
      %s27 = int_to_ptr.vmem [resolvable:$true] %s26
      %29 = dma.hbm_to_vmem [thread:$0]  %s1, 96, %s27, [#allocation5]
    $region9: #{tpu_custom_call.1} parent=1 // pred_fallthru
      _
    // Predicated region
    $region10: #{tpu_custom_call.1} parent=1 // pred_check
      _
    $region11: #{tpu_custom_call.1} parent=1 // pred_check_branch
      %31 = sbr.rel (0) target = $region13
    $region12: #{tpu_custom_call.1} parent=1 // pred_region
      %s33 = ssub.s32 96, 96
      %34 = vsyncadd [#allocation5], %s33
      %s36 = sshll.u32 [#allocation6], 4
      %s37 = int_to_ptr.vmem [resolvable:$true] %s36
      %39 = dma.hbm_to_vmem [thread:$0]  %s2, 96, %s37, [#allocation5]
    $region13: #{tpu_custom_call.1} parent=1 // pred_fallthru
      _
    // Predicated region
    $region14: #{tpu_custom_call.1} parent=1 // pred_check
      _
    $region15: #{tpu_custom_call.1} parent=1 // pred_check_branch
      %41 = sbr.rel (0) target = $region17
    $region16: #{tpu_custom_call.1} parent=1 // pred_region
      %42 = dma.done [#allocation3], 768
    $region17: #{tpu_custom_call.1} parent=1 // pred_fallthru
      _
    // Predicated region
    $region18: #{tpu_custom_call.1} parent=1 // pred_check
      _
    $region19: #{tpu_custom_call.1} parent=1 // pred_check_branch
      %44 = sbr.rel (0) target = $region21
    $region20: #{tpu_custom_call.1} parent=1 // pred_region
      %45 = dma.done [#allocation5], 96
    $region21: #{tpu_custom_call.1} parent=1 // pred_fallthru
      _
    // Predicated region
    $region22: #{tpu_custom_call.1} parent=1 // pred_check
      _
    $region23: #{tpu_custom_call.1} parent=1 // pred_check_branch
      %47 = sbr.rel (0) target = $region25
    $region24: #{tpu_custom_call.1} parent=1 // pred_region
      %48 = dma.done [#allocation5], 96
    $region25: #{tpu_custom_call.1} parent=1 // pred_fallthru
      _
    %v49 = vld [vmem:[#allocation2] sm:$0xff]
    %v50 = vld [vmem:[#allocation2 + $0x8] sm:$0xff]
    %v51 = vld [vmem:[#allocation2 + $0x10] sm:$0xff]
    %v52 = vld [vmem:[#allocation2 + $0x18] sm:$0xff]
    %v53 = vld [vmem:[#allocation2 + $0x20] sm:$0xff]
    %v54 = vld [vmem:[#allocation2 + $0x28] sm:$0xff]
    %v55 = vld [vmem:[#allocation4] sm:$0x3f]
    %v57 = vlaneseq
    %v58 = vshrl.u32 %v57, 7
    %v59 = vsub.s32 0, %v58
    %v60 = vrot.slane %v55, %v59
    %v61 = vlaneseq
    %v62 = vshrl.u32 %v61, 7
    %v63 = vsub.s32 1, %v62
    %v64 = vrot.slane %v55, %v63
    %v65 = vlaneseq
    %v66 = vshrl.u32 %v65, 7
    %v67 = vsub.s32 2, %v66
    %v68 = vrot.slane %v55, %v67
    %v69 = vlaneseq
    %v70 = vshrl.u32 %v69, 7
    %v71 = vsub.s32 3, %v70
    %v72 = vrot.slane %v55, %v71
    %v73 = vlaneseq
    %v74 = vshrl.u32 %v73, 7
    %v75 = vsub.s32 4, %v74
    %v76 = vrot.slane %v55, %v75
    %v77 = vlaneseq
    %v78 = vshrl.u32 %v77, 7
    %v79 = vsub.s32 5, %v78
    %v80 = vrot.slane %v55, %v79
    %v87 = vsub.f32 %v49, %v60
    %v88 = vsub.f32 %v50, %v64
    %v89 = vsub.f32 %v51, %v68
    %v90 = vsub.f32 %v52, %v72
    %v91 = vsub.f32 %v53, %v76
    %v92 = vsub.f32 %v54, %v80
    %v93 = vmul.f32 %v87, %v87
    %v94 = vmul.f32 %v88, %v88
    %v95 = vmul.f32 %v89, %v89
    %v96 = vmul.f32 %v90, %v90
    %v97 = vmul.f32 %v91, %v91
    %v98 = vmul.f32 %v92, %v92
    %99 = vrot.lane.b32.xlu0 %v93, 1
    %v100 = vpop.permute.xlu0 %99
    %101 = vrot.lane.b32.xlu0 %v94, 1
    %v102 = vpop.permute.xlu0 %101
    %103 = vrot.lane.b32.xlu0 %v95, 1
    %v104 = vpop.permute.xlu0 %103
    %105 = vrot.lane.b32.xlu0 %v96, 1
    %v106 = vpop.permute.xlu0 %105
    %107 = vrot.lane.b32.xlu0 %v97, 1
    %v108 = vpop.permute.xlu0 %107
    %109 = vrot.lane.b32.xlu0 %v98, 1
    %v110 = vpop.permute.xlu0 %109
    %v111 = vlaneseq
    %v112 = vand.u32 %v111, 127
    %vm113 = vcmp.lt.s32.totalorder %v112, 1
    %v114 = vsel %vm113, %v108, %v110
    %v115 = vsel %vm113, %v106, %v108
    %v116 = vsel %vm113, %v104, %v106
    %v117 = vsel %vm113, %v102, %v104
    %v118 = vsel %vm113, %v100, %v102
    %v119 = vsel %vm113, %v110, %v100
    %v120 = vadd.f32 %v93, %v119
    %v121 = vadd.f32 %v94, %v118
    %v122 = vadd.f32 %v95, %v117
    %v123 = vadd.f32 %v96, %v116
    %v124 = vadd.f32 %v97, %v115
    %v125 = vadd.f32 %v98, %v114
    %v126 = vrsqrt.pop %v120
    %v127 = vmul.f32 %v120, %v126
    %vm128 = vcmp.eq.f32.partialorder %v120, inf
    %v129 = vsel %vm128, %v120, %v127
    %vm130 = vcmp.eq.f32.partialorder %v120, 0.0
    %v131 = vand.u32 %v120, 2147483648
    %v132 = vsel %vm130, %v131, %v129
    %v133 = vrsqrt.pop %v121
    %v134 = vmul.f32 %v121, %v133
    %vm135 = vcmp.eq.f32.partialorder %v121, inf
    %v136 = vsel %vm135, %v121, %v134
    %vm137 = vcmp.eq.f32.partialorder %v121, 0.0
    %v138 = vand.u32 %v121, 2147483648
    %v139 = vsel %vm137, %v138, %v136
    %v140 = vrsqrt.pop %v122
    %v141 = vmul.f32 %v122, %v140
    %vm142 = vcmp.eq.f32.partialorder %v122, inf
    %v143 = vsel %vm142, %v122, %v141
    %vm144 = vcmp.eq.f32.partialorder %v122, 0.0
    %v145 = vand.u32 %v122, 2147483648
    %v146 = vsel %vm144, %v145, %v143
    %v147 = vrsqrt.pop %v123
    %v148 = vmul.f32 %v123, %v147
    %vm149 = vcmp.eq.f32.partialorder %v123, inf
    %v150 = vsel %vm149, %v123, %v148
    %vm151 = vcmp.eq.f32.partialorder %v123, 0.0
    %v152 = vand.u32 %v123, 2147483648
    %v153 = vsel %vm151, %v152, %v150
    %v154 = vrsqrt.pop %v124
    %v155 = vmul.f32 %v124, %v154
    %vm156 = vcmp.eq.f32.partialorder %v124, inf
    %v157 = vsel %vm156, %v124, %v155
    %vm158 = vcmp.eq.f32.partialorder %v124, 0.0
    %v159 = vand.u32 %v124, 2147483648
    %v160 = vsel %vm158, %v159, %v157
    %v161 = vrsqrt.pop %v125
    %v162 = vmul.f32 %v125, %v161
    %vm163 = vcmp.eq.f32.partialorder %v125, inf
    %v164 = vsel %vm163, %v125, %v162
    %vm165 = vcmp.eq.f32.partialorder %v125, 0.0
    %v166 = vand.u32 %v125, 2147483648
    %v167 = vsel %vm165, %v166, %v164
    %vm168 = vcmp.le.f32.partialorder %v120, 0.25
    %vm169 = vcmp.le.f32.partialorder %v121, 0.25
    %vm170 = vcmp.le.f32.partialorder %v122, 0.25
    %vm171 = vcmp.le.f32.partialorder %v123, 0.25
    %vm172 = vcmp.le.f32.partialorder %v124, 0.25
    %vm173 = vcmp.le.f32.partialorder %v125, 0.25
    %v174 = vsel %vm168, %v132, 0.0
    %v175 = vsel %vm169, %v139, 0.0
    %v176 = vsel %vm170, %v146, 0.0
    %v177 = vsel %vm171, %v153, 0.0
    %v178 = vsel %vm172, %v160, 0.0
    %v179 = vsel %vm173, %v167, 0.0
    %v180 = vld [vmem:[#allocation6] sm:$0x3f]
    %v182 = vlaneseq
    %v183 = vshrl.u32 %v182, 7
    %v184 = vsub.s32 0, %v183
    %v185 = vrot.slane %v180, %v184
    %v186 = vlaneseq
    %v187 = vshrl.u32 %v186, 7
    %v188 = vsub.s32 1, %v187
    %v189 = vrot.slane %v180, %v188
    %v190 = vlaneseq
    %v191 = vshrl.u32 %v190, 7
    %v192 = vsub.s32 2, %v191
    %v193 = vrot.slane %v180, %v192
    %v194 = vlaneseq
    %v195 = vshrl.u32 %v194, 7
    %v196 = vsub.s32 3, %v195
    %v197 = vrot.slane %v180, %v196
    %v198 = vlaneseq
    %v199 = vshrl.u32 %v198, 7
    %v200 = vsub.s32 4, %v199
    %v201 = vrot.slane %v180, %v200
    %v202 = vlaneseq
    %v203 = vshrl.u32 %v202, 7
    %v204 = vsub.s32 5, %v203
    %v205 = vrot.slane %v180, %v204
    %v212 = vmul.f32 %v174, %v185
    %v213 = vmul.f32 %v175, %v189
    %v214 = vmul.f32 %v176, %v193
    %v215 = vmul.f32 %v177, %v197
    %v216 = vmul.f32 %v178, %v201
    %v217 = vmul.f32 %v179, %v205
    %v218 = vadd.f32 %v212, %v213
    %v219 = vadd.f32 %v218, %v214
    %v220 = vadd.f32 %v219, %v215
    %v221 = vadd.f32 %v220, %v216
    %v222 = vadd.f32 %v221, %v217
    %223 = vadd.xlane.f32.xlu0 %v222
    %v224 = vpop.xlane.xlu0 %223
    %v225 = vmul.f32 %v224, -0.0078125
    %vm226 = vcmask 7168
    %227 = vst.msk [vmem:[%s3] sm:$0xff] %vm226, %v225
    // Predicated region
    $region26: #{tpu_custom_call.1} parent=1 // pred_check
      _
    $region27: #{tpu_custom_call.1} parent=1 // pred_check_branch
      %229 = sbr.rel (0) target = $region29
    $region28: #{tpu_custom_call.1} parent=1 // pred_region
      _
    $region29: #{tpu_custom_call.1} parent=1 // pred_fallthru
      _
    // Predicated region
    $region30: #{tpu_custom_call.1} parent=1 // pred_check
      _
    $region31: #{tpu_custom_call.1} parent=1 // pred_check_branch
      %231 = sbr.rel (0) target = $region33
    $region32: #{tpu_custom_call.1} parent=1 // pred_region
      _
    $region33: #{tpu_custom_call.1} parent=1 // pred_fallthru
      _
    %232 = vsyncpa [#allocation3], 1
    %233 = vsyncpa [#allocation5], 1

</llo_original>
